<compile_context>
chip_gen: v5e
topology: v5e:2x2
jax: 0.10.0
libtpu: 0.0.40
codegen_flags: <defaults>
</compile_context>

<pallas_src>
import jax
import jax.numpy as jnp
from jax.experimental import pallas as pl
from jax.experimental.pallas import tpu as pltpu


# ----------------------------- Pallas kernel -------------------------------


def fused_kernel(
    x_ref,        # (M, D)    flattened batch node features (torch_geo_batch.x)
    adj_ref,      # (M, M)    block-diagonal dense adjacency, adj[i, j] = #edges j -> i
    wg_ref,       # (L, 2D, D) fused GNN weights [W_root ; W_nbr] per layer
    bg_ref,       # (L, 1, D)  GNN biases
    wq_ref, bq_ref,   # (D, D), (1, D)
    wk_ref, bk_ref,
    wv_ref, bv_ref,
    wp_ref, bp_ref,   # folded output projection: wo @ (wc[:D]+wc[D:]), bo @ ... + bc
    out_ref,      # (M, 2D)  [:, :D] = GNN embedding, [:, D:] = attention output
):
    x = x_ref[...].astype(jnp.float32)
    adj = adj_ref[...].astype(jnp.float32)
    n_layers = wg_ref.shape[0]
    D = x_ref.shape[1]

    # ---- GNN stack: h' = tanh([h | A@h] @ [W_root ; W_nbr] + b) ----
    h = x
    for l in range(n_layers):  # static unroll over layers
        agg = jnp.dot(adj, h, preferred_element_type=jnp.float32)   # sum aggregation
        hz = jnp.concatenate([h, agg], axis=-1)                     # (M, 2D) -> K fused
        h = jnp.tanh(
            jnp.dot(hz, wg_ref[l], preferred_element_type=jnp.float32) + bg_ref[l]
        )

    # ---- double-headed attention on the raw flattened features ----
    # Both heads identical (shared layers, input1 == input2, eval mode); head 2 and
    # the combination layer were folded into wp/bp in the wrapper.
    q = jnp.dot(x, wq_ref[...], preferred_element_type=jnp.float32) + bq_ref[...]
    k = jnp.dot(x, wk_ref[...], preferred_element_type=jnp.float32) + bk_ref[...]
    v = jnp.dot(x, wv_ref[...], preferred_element_type=jnp.float32) + bv_ref[...]

    s = jnp.dot(q, k.T, preferred_element_type=jnp.float32)  # no 1/sqrt(d) (matches torch)
    s = s - jnp.max(s, axis=-1, keepdims=True)
    p = jnp.exp(s)
    p = p * pl.reciprocal(jnp.sum(p, axis=-1, keepdims=True), approx=True)

    attended = jnp.dot(p, v, preferred_element_type=jnp.float32)
    att = jnp.dot(attended, wp_ref[...], preferred_element_type=jnp.float32) + bp_ref[...]

    # ---- fused final concat: two lane-aligned half-slab stores ----
    out_ref[:, :D] = h.astype(out_ref.dtype)
    out_ref[:, D:] = att.astype(out_ref.dtype)


# ------------------------------ JAX wrapper ---------------------------------


def _full_spec(shape):
    """BlockSpec covering the whole array (block == full dims)."""
    zeros = (0,) * len(shape)
    return pl.BlockSpec(shape, lambda *_, _z=zeros: _z)


@jax.jit
def pre_embedded_graph_encoder_with_attention(batch_node_tsr, adj_block, params):
    """batch_node_tsr: (B, N, D) f32; adj_block: (B*N, B*N) block-diagonal f32."""
    B, N, D = batch_node_tsr.shape
    M = B * N
    L = params["w_root"].shape[0]

    x_flat = batch_node_tsr.reshape(M, D)  # flattened PyG batch (free reshape)

    # ---- algebraic folds (eval mode, shared heads => out2 == out1) ----
    wc_fold = params["wc"][:D, :] + params["wc"][D:, :]          # (D, D)
    w_post = params["wo"] @ wc_fold                              # (D, D)
    b_post = params["bo"] @ wc_fold + params["bc"]               # (1, D)

    # ---- fused per-layer GNN weights: contraction over K = 2D ----
    w_gnn = jnp.concatenate([params["w_root"], params["w_nbr"]], axis=1)  # (L, 2D, D)

    operands = [
        x_flat, adj_block, w_gnn, params["b_gnn"],
        params["wq"], params["bq"],
        params["wk"], params["bk"],
        params["wv"], params["bv"],
        w_post, b_post,
    ]

    # Advisory cost estimate for XLA's scheduler.
    gnn_flops = L * (2 * M * M * D + 2 * M * (2 * D) * D)
    attn_flops = 3 * 2 * M * D * D + 2 * (2 * M * M * D) + 2 * M * D * D
    bytes_accessed = 4 * (sum(int(a.size) for a in operands) + M * 2 * D)
    cost = pl.CostEstimate(
        flops=int(gnn_flops + attn_flops),
        transcendentals=int(L * M * D + M * M),
        bytes_accessed=int(bytes_accessed),
    )

    out_flat = pl.pallas_call(
        fused_kernel,
        out_shape=jax.ShapeDtypeStruct((M, 2 * D), jnp.float32),
        grid=(1,),
        in_specs=[_full_spec(a.shape) for a in operands],
        out_specs=_full_spec((M, 2 * D)),
        compiler_params=pltpu.CompilerParams(
            dimension_semantics=("arbitrary",),
            vmem_limit_bytes=64 << 20,
        ),
        cost_estimate=cost,
    )(*operands)

    return out_flat.reshape(B, N, 2 * D)  # free reshape (contiguous)


# ----------------------- pure-JAX reference (unfused) ------------------------


def reference_forward(batch_node_tsr, adj_block, params):
    """Unfused reference mirroring the torch forward (eval mode)."""
    B, N, D = batch_node_tsr.shape
    M = B * N
    x = batch_node_tsr.reshape(M, D)
    h = x
    for l in range(params["w_root"].shape[0]):
        agg = adj_block @ h
        h = jnp.tanh(h @ params["w_root"][l] + agg @ params["w_nbr"][l] + params["b_gnn"][l])
    q = x @ params["wq"] + params["bq"]
    k = x @ params["wk"] + params["bk"]
    v = x @ params["wv"] + params["bv"]
    p = jax.nn.softmax(q @ k.T, axis=-1)
    out1 = (p @ v) @ params["wo"] + params["bo"]
    att = jnp.concatenate([out1, out1], axis=-1) @ params["wc"] + params["bc"]
    return jnp.concatenate([h.reshape(B, N, D), att.reshape(B, N, D)], axis=-1)


# ------------------------- deterministic parameters --------------------------


def make_params(key, D, n_layers=4):
    ks = jax.random.split(key, 16)
    s = 0.1
    return {
        # GNN (GraphConv-style) stacked weights, already (in, out) oriented.
        "w_root": s * jax.random.normal(ks[0], (n_layers, D, D), jnp.float32),
        "w_nbr": s * jax.random.normal(ks[1], (n_layers, D, D), jnp.float32),
        "b_gnn": s * jax.random.normal(ks[2], (n_layers, 1, D), jnp.float32),
        # DoubleHeadedAttention
        "wq": s * jax.random.normal(ks[3], (D, D), jnp.float32),
        "bq": s * jax.random.normal(ks[4], (1, D), jnp.float32),
        "wk": s * jax.random.normal(ks[5], (D, D), jnp.float32),
        "bk": s * jax.random.normal(ks[6], (1, D), jnp.float32),
        "wv": s * jax.random.normal(ks[7], (D, D), jnp.float32),
        "bv": s * jax.random.normal(ks[8], (1, D), jnp.float32),
        "wo": s * jax.random.normal(ks[9], (D, D), jnp.float32),
        "bo": s * jax.random.normal(ks[10], (1, D), jnp.float32),
        # combination_layer: Linear(2D -> D)
        "wc": s * jax.random.normal(ks[11], (2 * D, D), jnp.float32),
        "bc": s * jax.random.normal(ks[12], (1, D), jnp.float32),
        # init_ff (Linear(2D -> D)) exists in the module but is unused on this
        # forward path (add_normal_prior=False); kept for shape completeness.
        "w_init_ff": s * jax.random.normal(ks[13], (2 * D, D), jnp.float32),
        "b_init_ff": s * jax.random.normal(ks[14], (1, D), jnp.float32),
    }


def edges_to_block_diag_adj(edge_list, N):
    """edge_list: list of (2, E) int arrays (src row 0, dst row 1) per graph.

    Returns the (B*N, B*N) block-diagonal dense adjacency of the flattened PyG
    batch (adj[i, j] = #edges j -> i), exactly mirroring Batch.from_data_list.
    """
    B = len(edge_list)
    M = B * N
    a = jnp.zeros((M, M), jnp.float32)
    for b, e in enumerate(edge_list):
        src = e[0] + b * N
        dst = e[1] + b * N
        a = a.at[dst, src].add(1.0)
    return a


# ----------------------------------- main ------------------------------------

if __name__ == "__main__":
    # in_channels == hidden_size == out_channels == D (required by the torch module);
    # D = 128 keeps every matmul operand and both output half-slabs lane-aligned.
    B, N, D = 2, 8, 128
    key = jax.random.PRNGKey(0)
    k_x, k_p = jax.random.split(key)

    batch_node_tsr = jax.random.normal(k_x, (B, N, D), jnp.float32)

    # Deterministic edge lists: a bidirectional ring per graph.
    idx = jnp.arange(N)
    ring_src = jnp.concatenate([idx, (idx + 1) % N])
    ring_dst = jnp.concatenate([(idx + 1) % N, idx])
    edge_tsr_list = [jnp.stack([ring_src, ring_dst]) for _ in range(B)]
    adj_block = edges_to_block_diag_adj(edge_tsr_list, N)

    params = make_params(k_p, D, n_layers=4)

    out = pre_embedded_graph_encoder_with_attention(batch_node_tsr, adj_block, params)
    out = jax.block_until_ready(out)

    assert out.shape == (B, N, 2 * D), out.shape
    assert bool(jnp.all(jnp.isfinite(out)))

    # Validate the fused kernel (incl. algebraic folds) against the unfused reference.
    ref = reference_forward(batch_node_tsr, adj_block, params)
    assert jnp.allclose(out, ref, atol=5e-3, rtol=5e-3), float(jnp.max(jnp.abs(out - ref)))

    print("KERNEL_OK")
</pallas_src>

<mosaic_0001>
module attributes {stable_mosaic.version = 11 : i64} {
  func.func @fused_kernel(%arg0: i32, %arg1: memref<16x128xf32, #tpu.memory_space<vmem>>, %arg2: memref<16x16xf32, #tpu.memory_space<vmem>>, %arg3: memref<4x256x128xf32, #tpu.memory_space<vmem>>, %arg4: memref<4x1x128xf32, #tpu.memory_space<vmem>>, %arg5: memref<128x128xf32, #tpu.memory_space<vmem>>, %arg6: memref<1x128xf32, #tpu.memory_space<vmem>>, %arg7: memref<128x128xf32, #tpu.memory_space<vmem>>, %arg8: memref<1x128xf32, #tpu.memory_space<vmem>>, %arg9: memref<128x128xf32, #tpu.memory_space<vmem>>, %arg10: memref<1x128xf32, #tpu.memory_space<vmem>>, %arg11: memref<128x128xf32, #tpu.memory_space<vmem>>, %arg12: memref<1x128xf32, #tpu.memory_space<vmem>>, %arg13: memref<16x256xf32, #tpu.memory_space<vmem>>) attributes {dimension_semantics = [#tpu.dimension_semantics<arbitrary>], iteration_bounds = array<i64: 1>, scalar_prefetch = 0 : i64, scratch_operands = 0 : i64, tpu.core_type = #tpu.core_type<tc>, window_params = [{pipeline_mode = #tpu.pipeline_mode<synchronous>, transform_indices = @transform_0, window_bounds = array<i64: 16, 128>}, {pipeline_mode = #tpu.pipeline_mode<synchronous>, transform_indices = @transform_1, window_bounds = array<i64: 16, 16>}, {pipeline_mode = #tpu.pipeline_mode<synchronous>, transform_indices = @transform_2, window_bounds = array<i64: 4, 256, 128>}, {pipeline_mode = #tpu.pipeline_mode<synchronous>, transform_indices = @transform_3, window_bounds = array<i64: 4, 1, 128>}, {pipeline_mode = #tpu.pipeline_mode<synchronous>, transform_indices = @transform_4, window_bounds = array<i64: 128, 128>}, {pipeline_mode = #tpu.pipeline_mode<synchronous>, transform_indices = @transform_5, window_bounds = array<i64: 1, 128>}, {pipeline_mode = #tpu.pipeline_mode<synchronous>, transform_indices = @transform_6, window_bounds = array<i64: 128, 128>}, {pipeline_mode = #tpu.pipeline_mode<synchronous>, transform_indices = @transform_7, window_bounds = array<i64: 1, 128>}, {pipeline_mode = #tpu.pipeline_mode<synchronous>, transform_indices = @transform_8, window_bounds = array<i64: 128, 128>}, {pipeline_mode = #tpu.pipeline_mode<synchronous>, transform_indices = @transform_9, window_bounds = array<i64: 1, 128>}, {pipeline_mode = #tpu.pipeline_mode<synchronous>, transform_indices = @transform_10, window_bounds = array<i64: 128, 128>}, {pipeline_mode = #tpu.pipeline_mode<synchronous>, transform_indices = @transform_11, window_bounds = array<i64: 1, 128>}, {pipeline_mode = #tpu.pipeline_mode<synchronous>, transform_indices = @transform_12, window_bounds = array<i64: 16, 256>}]} {
    %c0 = arith.constant 0 : index
    %c0_0 = arith.constant 0 : index
    %0 = vector.load %arg1[%c0, %c0_0] : memref<16x128xf32, #tpu.memory_space<vmem>>, vector<16x128xf32>
    %c0_1 = arith.constant 0 : index
    %c0_2 = arith.constant 0 : index
    %1 = vector.load %arg2[%c0_1, %c0_2] : memref<16x16xf32, #tpu.memory_space<vmem>>, vector<16x16xf32>
    %cst = arith.constant dense<0.000000e+00> : vector<16x128xf32>
    %2 = tpu.matmul %1, %0, %cst {dimension_numbers = #tpu.dot_dimension_numbers<[1], [0], [0], [1], [0, 0, 1, 1], [], []>} : vector<16x16xf32>, vector<16x128xf32>, vector<16x128xf32> -> vector<16x128xf32>
    %3 = tpu.concatenate %0, %2 in 1 : vector<16x128xf32>, vector<16x128xf32> -> vector<16x256xf32>
    %c0_3 = arith.constant 0 : index
    %c0_4 = arith.constant 0 : index
    %c0_5 = arith.constant 0 : index
    %4 = vector.load %arg3[%c0_3, %c0_4, %c0_5] : memref<4x256x128xf32, #tpu.memory_space<vmem>>, vector<1x256x128xf32>
    %5 = vector.shape_cast %4 : vector<1x256x128xf32> to vector<256x128xf32>
    %cst_6 = arith.constant dense<0.000000e+00> : vector<16x128xf32>
    %6 = tpu.matmul %3, %5, %cst_6 {dimension_numbers = #tpu.dot_dimension_numbers<[1], [0], [0], [1], [0, 0, 1, 1], [], []>} : vector<16x256xf32>, vector<256x128xf32>, vector<16x128xf32> -> vector<16x128xf32>
    %c0_7 = arith.constant 0 : index
    %c0_8 = arith.constant 0 : index
    %c0_9 = arith.constant 0 : index
    %7 = vector.load %arg4[%c0_7, %c0_8, %c0_9] : memref<4x1x128xf32, #tpu.memory_space<vmem>>, vector<1x1x128xf32>
    %8 = vector.shape_cast %7 : vector<1x1x128xf32> to vector<1x128xf32>
    %9 = vector.broadcast %8 : vector<1x128xf32> to vector<16x128xf32>
    %10 = arith.addf %6, %9 : vector<16x128xf32>
    %11 = math.tanh %10 : vector<16x128xf32>
    %cst_10 = arith.constant dense<0.000000e+00> : vector<16x128xf32>
    %12 = tpu.matmul %1, %11, %cst_10 {dimension_numbers = #tpu.dot_dimension_numbers<[1], [0], [0], [1], [0, 0, 1, 1], [], []>} : vector<16x16xf32>, vector<16x128xf32>, vector<16x128xf32> -> vector<16x128xf32>
    %13 = tpu.concatenate %11, %12 in 1 : vector<16x128xf32>, vector<16x128xf32> -> vector<16x256xf32>
    %c1 = arith.constant 1 : index
    %c0_11 = arith.constant 0 : index
    %c0_12 = arith.constant 0 : index
    %14 = vector.load %arg3[%c1, %c0_11, %c0_12] : memref<4x256x128xf32, #tpu.memory_space<vmem>>, vector<1x256x128xf32>
    %15 = vector.shape_cast %14 : vector<1x256x128xf32> to vector<256x128xf32>
    %cst_13 = arith.constant dense<0.000000e+00> : vector<16x128xf32>
    %16 = tpu.matmul %13, %15, %cst_13 {dimension_numbers = #tpu.dot_dimension_numbers<[1], [0], [0], [1], [0, 0, 1, 1], [], []>} : vector<16x256xf32>, vector<256x128xf32>, vector<16x128xf32> -> vector<16x128xf32>
    %c1_14 = arith.constant 1 : index
    %c0_15 = arith.constant 0 : index
    %c0_16 = arith.constant 0 : index
    %17 = vector.load %arg4[%c1_14, %c0_15, %c0_16] : memref<4x1x128xf32, #tpu.memory_space<vmem>>, vector<1x1x128xf32>
    %18 = vector.shape_cast %17 : vector<1x1x128xf32> to vector<1x128xf32>
    %19 = vector.broadcast %18 : vector<1x128xf32> to vector<16x128xf32>
    %20 = arith.addf %16, %19 : vector<16x128xf32>
    %21 = math.tanh %20 : vector<16x128xf32>
    %cst_17 = arith.constant dense<0.000000e+00> : vector<16x128xf32>
    %22 = tpu.matmul %1, %21, %cst_17 {dimension_numbers = #tpu.dot_dimension_numbers<[1], [0], [0], [1], [0, 0, 1, 1], [], []>} : vector<16x16xf32>, vector<16x128xf32>, vector<16x128xf32> -> vector<16x128xf32>
    %23 = tpu.concatenate %21, %22 in 1 : vector<16x128xf32>, vector<16x128xf32> -> vector<16x256xf32>
    %c2 = arith.constant 2 : index
    %c0_18 = arith.constant 0 : index
    %c0_19 = arith.constant 0 : index
    %24 = vector.load %arg3[%c2, %c0_18, %c0_19] : memref<4x256x128xf32, #tpu.memory_space<vmem>>, vector<1x256x128xf32>
    %25 = vector.shape_cast %24 : vector<1x256x128xf32> to vector<256x128xf32>
    %cst_20 = arith.constant dense<0.000000e+00> : vector<16x128xf32>
    %26 = tpu.matmul %23, %25, %cst_20 {dimension_numbers = #tpu.dot_dimension_numbers<[1], [0], [0], [1], [0, 0, 1, 1], [], []>} : vector<16x256xf32>, vector<256x128xf32>, vector<16x128xf32> -> vector<16x128xf32>
    %c2_21 = arith.constant 2 : index
    %c0_22 = arith.constant 0 : index
    %c0_23 = arith.constant 0 : index
    %27 = vector.load %arg4[%c2_21, %c0_22, %c0_23] : memref<4x1x128xf32, #tpu.memory_space<vmem>>, vector<1x1x128xf32>
    %28 = vector.shape_cast %27 : vector<1x1x128xf32> to vector<1x128xf32>
    %29 = vector.broadcast %28 : vector<1x128xf32> to vector<16x128xf32>
    %30 = arith.addf %26, %29 : vector<16x128xf32>
    %31 = math.tanh %30 : vector<16x128xf32>
    %cst_24 = arith.constant dense<0.000000e+00> : vector<16x128xf32>
    %32 = tpu.matmul %1, %31, %cst_24 {dimension_numbers = #tpu.dot_dimension_numbers<[1], [0], [0], [1], [0, 0, 1, 1], [], []>} : vector<16x16xf32>, vector<16x128xf32>, vector<16x128xf32> -> vector<16x128xf32>
    %33 = tpu.concatenate %31, %32 in 1 : vector<16x128xf32>, vector<16x128xf32> -> vector<16x256xf32>
    %c3 = arith.constant 3 : index
    %c0_25 = arith.constant 0 : index
    %c0_26 = arith.constant 0 : index
    %34 = vector.load %arg3[%c3, %c0_25, %c0_26] : memref<4x256x128xf32, #tpu.memory_space<vmem>>, vector<1x256x128xf32>
    %35 = vector.shape_cast %34 : vector<1x256x128xf32> to vector<256x128xf32>
    %cst_27 = arith.constant dense<0.000000e+00> : vector<16x128xf32>
    %36 = tpu.matmul %33, %35, %cst_27 {dimension_numbers = #tpu.dot_dimension_numbers<[1], [0], [0], [1], [0, 0, 1, 1], [], []>} : vector<16x256xf32>, vector<256x128xf32>, vector<16x128xf32> -> vector<16x128xf32>
    %c3_28 = arith.constant 3 : index
    %c0_29 = arith.constant 0 : index
    %c0_30 = arith.constant 0 : index
    %37 = vector.load %arg4[%c3_28, %c0_29, %c0_30] : memref<4x1x128xf32, #tpu.memory_space<vmem>>, vector<1x1x128xf32>
    %38 = vector.shape_cast %37 : vector<1x1x128xf32> to vector<1x128xf32>
    %39 = vector.broadcast %38 : vector<1x128xf32> to vector<16x128xf32>
    %40 = arith.addf %36, %39 : vector<16x128xf32>
    %41 = math.tanh %40 : vector<16x128xf32>
    %c0_31 = arith.constant 0 : index
    %c0_32 = arith.constant 0 : index
    %42 = vector.load %arg5[%c0_31, %c0_32] : memref<128x128xf32, #tpu.memory_space<vmem>>, vector<128x128xf32>
    %cst_33 = arith.constant dense<0.000000e+00> : vector<16x128xf32>
    %43 = tpu.matmul %0, %42, %cst_33 {dimension_numbers = #tpu.dot_dimension_numbers<[1], [0], [0], [1], [0, 0, 1, 1], [], []>} : vector<16x128xf32>, vector<128x128xf32>, vector<16x128xf32> -> vector<16x128xf32>
    %c0_34 = arith.constant 0 : index
    %c0_35 = arith.constant 0 : index
    %44 = vector.load %arg6[%c0_34, %c0_35] : memref<1x128xf32, #tpu.memory_space<vmem>>, vector<1x128xf32>
    %45 = vector.broadcast %44 : vector<1x128xf32> to vector<16x128xf32>
    %46 = arith.addf %43, %45 : vector<16x128xf32>
    %c0_36 = arith.constant 0 : index
    %c0_37 = arith.constant 0 : index
    %47 = vector.load %arg7[%c0_36, %c0_37] : memref<128x128xf32, #tpu.memory_space<vmem>>, vector<128x128xf32>
    %cst_38 = arith.constant dense<0.000000e+00> : vector<16x128xf32>
    %48 = tpu.matmul %0, %47, %cst_38 {dimension_numbers = #tpu.dot_dimension_numbers<[1], [0], [0], [1], [0, 0, 1, 1], [], []>} : vector<16x128xf32>, vector<128x128xf32>, vector<16x128xf32> -> vector<16x128xf32>
    %c0_39 = arith.constant 0 : index
    %c0_40 = arith.constant 0 : index
    %49 = vector.load %arg8[%c0_39, %c0_40] : memref<1x128xf32, #tpu.memory_space<vmem>>, vector<1x128xf32>
    %50 = vector.broadcast %49 : vector<1x128xf32> to vector<16x128xf32>
    %51 = arith.addf %48, %50 : vector<16x128xf32>
    %c0_41 = arith.constant 0 : index
    %c0_42 = arith.constant 0 : index
    %52 = vector.load %arg9[%c0_41, %c0_42] : memref<128x128xf32, #tpu.memory_space<vmem>>, vector<128x128xf32>
    %cst_43 = arith.constant dense<0.000000e+00> : vector<16x128xf32>
    %53 = tpu.matmul %0, %52, %cst_43 {dimension_numbers = #tpu.dot_dimension_numbers<[1], [0], [0], [1], [0, 0, 1, 1], [], []>} : vector<16x128xf32>, vector<128x128xf32>, vector<16x128xf32> -> vector<16x128xf32>
    %c0_44 = arith.constant 0 : index
    %c0_45 = arith.constant 0 : index
    %54 = vector.load %arg10[%c0_44, %c0_45] : memref<1x128xf32, #tpu.memory_space<vmem>>, vector<1x128xf32>
    %55 = vector.broadcast %54 : vector<1x128xf32> to vector<16x128xf32>
    %56 = arith.addf %53, %55 : vector<16x128xf32>
    %57 = tpu.transpose %51, [1, 0] : vector<16x128xf32> -> vector<128x16xf32>
    %cst_46 = arith.constant dense<0.000000e+00> : vector<16x16xf32>
    %58 = tpu.matmul %46, %57, %cst_46 {dimension_numbers = #tpu.dot_dimension_numbers<[1], [0], [0], [1], [0, 0, 1, 1], [], []>} : vector<16x128xf32>, vector<128x16xf32>, vector<16x16xf32> -> vector<16x16xf32>
    %cst_47 = arith.constant dense<0xFF800000> : vector<16xf32>
    %59 = vector.multi_reduction <maximumf>, %58, %cst_47 [1] : vector<16x16xf32> to vector<16xf32>
    %60 = vector.shape_cast %59 : vector<16xf32> to vector<16x1xf32>
    %61 = vector.broadcast %60 : vector<16x1xf32> to vector<16x16xf32>
    %62 = arith.subf %58, %61 : vector<16x16xf32>
    %63 = math.exp %62 : vector<16x16xf32>
    %cst_48 = arith.constant dense<0.000000e+00> : vector<16xf32>
    %64 = vector.multi_reduction <add>, %63, %cst_48 [1] : vector<16x16xf32> to vector<16xf32>
    %65 = vector.shape_cast %64 : vector<16xf32> to vector<16x1xf32>
    %66 = tpu.reciprocal %65 {approx = true} : vector<16x1xf32> -> vector<16x1xf32>
    %67 = vector.broadcast %66 : vector<16x1xf32> to vector<16x16xf32>
    %68 = arith.mulf %63, %67 : vector<16x16xf32>
    %cst_49 = arith.constant dense<0.000000e+00> : vector<16x128xf32>
    %69 = tpu.matmul %68, %56, %cst_49 {dimension_numbers = #tpu.dot_dimension_numbers<[1], [0], [0], [1], [0, 0, 1, 1], [], []>} : vector<16x16xf32>, vector<16x128xf32>, vector<16x128xf32> -> vector<16x128xf32>
    %c0_50 = arith.constant 0 : index
    %c0_51 = arith.constant 0 : index
    %70 = vector.load %arg11[%c0_50, %c0_51] : memref<128x128xf32, #tpu.memory_space<vmem>>, vector<128x128xf32>
    %cst_52 = arith.constant dense<0.000000e+00> : vector<16x128xf32>
    %71 = tpu.matmul %69, %70, %cst_52 {dimension_numbers = #tpu.dot_dimension_numbers<[1], [0], [0], [1], [0, 0, 1, 1], [], []>} : vector<16x128xf32>, vector<128x128xf32>, vector<16x128xf32> -> vector<16x128xf32>
    %c0_53 = arith.constant 0 : index
    %c0_54 = arith.constant 0 : index
    %72 = vector.load %arg12[%c0_53, %c0_54] : memref<1x128xf32, #tpu.memory_space<vmem>>, vector<1x128xf32>
    %73 = vector.broadcast %72 : vector<1x128xf32> to vector<16x128xf32>
    %74 = arith.addf %71, %73 : vector<16x128xf32>
    %c0_55 = arith.constant 0 : index
    %c0_56 = arith.constant 0 : index
    %75 = vector.load %arg13[%c0_55, %c0_56] : memref<16x256xf32, #tpu.memory_space<vmem>>, vector<16x128xf32>
    tpu.vector_store %arg13[%c0_55, %c0_56], %41 {strides = array<i32>} : memref<16x256xf32, #tpu.memory_space<vmem>>, vector<16x128xf32>,
    %c0_57 = arith.constant 0 : index
    %c128 = arith.constant 128 : index
    %76 = vector.load %arg13[%c0_57, %c128] : memref<16x256xf32, #tpu.memory_space<vmem>>, vector<16x128xf32>
    tpu.vector_store %arg13[%c0_57, %c128], %74 {strides = array<i32>} : memref<16x256xf32, #tpu.memory_space<vmem>>, vector<16x128xf32>,
    return
  }
  func.func @transform_0(%arg0: i32) -> (i32, i32) {
    %c0_i32 = arith.constant 0 : i32
    %c0_i32_0 = arith.constant 0 : i32
    %c0_i32_1 = arith.constant 0 : i32
    return %c0_i32, %c0_i32_0 : i32, i32
  }
  func.func @transform_1(%arg0: i32) -> (i32, i32) {
    %c0_i32 = arith.constant 0 : i32
    %c0_i32_0 = arith.constant 0 : i32
    %c0_i32_1 = arith.constant 0 : i32
    return %c0_i32, %c0_i32_0 : i32, i32
  }
  func.func @transform_2(%arg0: i32) -> (i32, i32, i32) {
    %c0_i32 = arith.constant 0 : i32
    %c0_i32_0 = arith.constant 0 : i32
    %c0_i32_1 = arith.constant 0 : i32
    %c0_i32_2 = arith.constant 0 : i32
    return %c0_i32, %c0_i32_0, %c0_i32_1 : i32, i32, i32
  }
  func.func @transform_3(%arg0: i32) -> (i32, i32, i32) {
    %c0_i32 = arith.constant 0 : i32
    %c0_i32_0 = arith.constant 0 : i32
    %c0_i32_1 = arith.constant 0 : i32
    %c0_i32_2 = arith.constant 0 : i32
    return %c0_i32, %c0_i32_0, %c0_i32_1 : i32, i32, i32
  }
  func.func @transform_4(%arg0: i32) -> (i32, i32) {
    %c0_i32 = arith.constant 0 : i32
    %c0_i32_0 = arith.constant 0 : i32
    %c0_i32_1 = arith.constant 0 : i32
    return %c0_i32, %c0_i32_0 : i32, i32
  }
  func.func @transform_5(%arg0: i32) -> (i32, i32) {
    %c0_i32 = arith.constant 0 : i32
    %c0_i32_0 = arith.constant 0 : i32
    %c0_i32_1 = arith.constant 0 : i32
    return %c0_i32, %c0_i32_0 : i32, i32
  }
  func.func @transform_6(%arg0: i32) -> (i32, i32) {
    %c0_i32 = arith.constant 0 : i32
    %c0_i32_0 = arith.constant 0 : i32
    %c0_i32_1 = arith.constant 0 : i32
    return %c0_i32, %c0_i32_0 : i32, i32
  }
  func.func @transform_7(%arg0: i32) -> (i32, i32) {
    %c0_i32 = arith.constant 0 : i32
    %c0_i32_0 = arith.constant 0 : i32
    %c0_i32_1 = arith.constant 0 : i32
    return %c0_i32, %c0_i32_0 : i32, i32
  }
  func.func @transform_8(%arg0: i32) -> (i32, i32) {
    %c0_i32 = arith.constant 0 : i32
    %c0_i32_0 = arith.constant 0 : i32
    %c0_i32_1 = arith.constant 0 : i32
    return %c0_i32, %c0_i32_0 : i32, i32
  }
  func.func @transform_9(%arg0: i32) -> (i32, i32) {
    %c0_i32 = arith.constant 0 : i32
    %c0_i32_0 = arith.constant 0 : i32
    %c0_i32_1 = arith.constant 0 : i32
    return %c0_i32, %c0_i32_0 : i32, i32
  }
  func.func @transform_10(%arg0: i32) -> (i32, i32) {
    %c0_i32 = arith.constant 0 : i32
    %c0_i32_0 = arith.constant 0 : i32
    %c0_i32_1 = arith.constant 0 : i32
    return %c0_i32, %c0_i32_0 : i32, i32
  }
  func.func @transform_11(%arg0: i32) -> (i32, i32) {
    %c0_i32 = arith.constant 0 : i32
    %c0_i32_0 = arith.constant 0 : i32
    %c0_i32_1 = arith.constant 0 : i32
    return %c0_i32, %c0_i32_0 : i32, i32
  }
  func.func @transform_12(%arg0: i32) -> (i32, i32) {
    %c0_i32 = arith.constant 0 : i32
    %c0_i32_0 = arith.constant 0 : i32
    %c0_i32_1 = arith.constant 0 : i32
    return %c0_i32, %c0_i32_0 : i32, i32
  }
}

</mosaic_0001>

<llo_original>
// kernel: pre_embedded_graph_encoder_with_attention.1
$region0: #{pre_embedded_graph_encoder_with_attention.1}
  #allocation0 [shape = 'u32[]', space=smem, size = 0x4, offset = 0x4, fixed_abs, tag = 'smem constant byte address 0x4 - core index']
  #allocation1 [shape = 'u32[72,128]{1,0:T(1,128)}', space=vmem, size = 0x9000, scoped, tag = 'internal scratch']
  %s0 = inlined_call_operand.vmem [shape: f32[16,128], index: 0, kind: input, shape index: {}]
  %s1 = inlined_call_operand.vmem [shape: f32[16,16], index: 1, kind: input, shape index: {}]
  %s2 = inlined_call_operand.vmem [shape: f32[4,256,128], index: 2, kind: input, shape index: {}]
  %s3 = inlined_call_operand.vmem [shape: f32[4,1,128], index: 3, kind: input, shape index: {}]
  %s4 = inlined_call_operand.vmem [shape: f32[128,128], index: 4, kind: input, shape index: {}]
  %s5 = inlined_call_operand.vmem [shape: f32[1,128], index: 5, kind: input, shape index: {}]
  %s6 = inlined_call_operand.vmem [shape: f32[128,128], index: 6, kind: input, shape index: {}]
  %s7 = inlined_call_operand.vmem [shape: f32[1,128], index: 7, kind: input, shape index: {}]
  %s8 = inlined_call_operand.vmem [shape: f32[128,128], index: 8, kind: input, shape index: {}]
  %s9 = inlined_call_operand.vmem [shape: f32[1,128], index: 9, kind: input, shape index: {}]
  %s10 = inlined_call_operand.vmem [shape: f32[128,128], index: 10, kind: input, shape index: {}]
  %s11 = inlined_call_operand.vmem [shape: f32[1,128], index: 11, kind: input, shape index: {}]
  %s12 = inlined_call_operand.hbm [shape: f32[16,256], index: 12, kind: output, shape index: {}]
  %s13 = sld [smem:[#allocation0]]
  $region58: #{pre_embedded_graph_encoder_with_attention.1} parent=0
    _
  %s15 = ssub.s32 1, %s13
  %s16 = scalar_select 0, %s15, %s13
  $region1: #{pre_embedded_graph_encoder_with_attention.1} parent=0
    #allocation2 [shape = 'u8[16384]{0}', space=vmem, size = 0x4000, scoped, tag = 'output window, operand 0, single buffered']
    #allocation3 [shape = 's32[1]{0}', space=sflag, size = 0x4, scoped, tag = 'scoped memory for pre_embedded_graph_encoder_with_attention.1']
    %17 = vsyncpa [#allocation3], 0
    // Predicated region
    $region2: #{pre_embedded_graph_encoder_with_attention.1} parent=1 // pred_check
      _
    $region3: #{pre_embedded_graph_encoder_with_attention.1} parent=1 // pred_check_branch
      %19 = sbr.rel (0) target = $region5
    $region4: #{pre_embedded_graph_encoder_with_attention.1} parent=1 // pred_region
      _
    $region5: #{pre_embedded_graph_encoder_with_attention.1} parent=1 // pred_fallthru
      _
    // Predicated region
    $region6: #{pre_embedded_graph_encoder_with_attention.1} parent=1 // pred_check
      _
    $region7: #{pre_embedded_graph_encoder_with_attention.1} parent=1 // pred_check_branch
      %21 = sbr.rel (0) target = $region9
    $region8: #{pre_embedded_graph_encoder_with_attention.1} parent=1 // pred_region
      _
    $region9: #{pre_embedded_graph_encoder_with_attention.1} parent=1 // pred_fallthru
      _
    // Predicated region
    $region10: #{pre_embedded_graph_encoder_with_attention.1} parent=1 // pred_check
      _
    $region11: #{pre_embedded_graph_encoder_with_attention.1} parent=1 // pred_check_branch
      %23 = sbr.rel (0) target = $region13
    $region12: #{pre_embedded_graph_encoder_with_attention.1} parent=1 // pred_region
      _
    $region13: #{pre_embedded_graph_encoder_with_attention.1} parent=1 // pred_fallthru
      _
    // Predicated region
    $region14: #{pre_embedded_graph_encoder_with_attention.1} parent=1 // pred_check
      _
    $region15: #{pre_embedded_graph_encoder_with_attention.1} parent=1 // pred_check_branch
      %25 = sbr.rel (0) target = $region17
    $region16: #{pre_embedded_graph_encoder_with_attention.1} parent=1 // pred_region
      _
    $region17: #{pre_embedded_graph_encoder_with_attention.1} parent=1 // pred_fallthru
      _
    // Predicated region
    $region18: #{pre_embedded_graph_encoder_with_attention.1} parent=1 // pred_check
      _
    $region19: #{pre_embedded_graph_encoder_with_attention.1} parent=1 // pred_check_branch
      %27 = sbr.rel (0) target = $region21
    $region20: #{pre_embedded_graph_encoder_with_attention.1} parent=1 // pred_region
      _
    $region21: #{pre_embedded_graph_encoder_with_attention.1} parent=1 // pred_fallthru
      _
    // Predicated region
    $region22: #{pre_embedded_graph_encoder_with_attention.1} parent=1 // pred_check
      _
    $region23: #{pre_embedded_graph_encoder_with_attention.1} parent=1 // pred_check_branch
      %29 = sbr.rel (0) target = $region25
    $region24: #{pre_embedded_graph_encoder_with_attention.1} parent=1 // pred_region
      _
    $region25: #{pre_embedded_graph_encoder_with_attention.1} parent=1 // pred_fallthru
      _
    // Predicated region
    $region26: #{pre_embedded_graph_encoder_with_attention.1} parent=1 // pred_check
      _
    $region27: #{pre_embedded_graph_encoder_with_attention.1} parent=1 // pred_check_branch
      %31 = sbr.rel (0) target = $region29
    $region28: #{pre_embedded_graph_encoder_with_attention.1} parent=1 // pred_region
      _
    $region29: #{pre_embedded_graph_encoder_with_attention.1} parent=1 // pred_fallthru
      _
    // Predicated region
    $region30: #{pre_embedded_graph_encoder_with_attention.1} parent=1 // pred_check
      _
    $region31: #{pre_embedded_graph_encoder_with_attention.1} parent=1 // pred_check_branch
      %33 = sbr.rel (0) target = $region33
    $region32: #{pre_embedded_graph_encoder_with_attention.1} parent=1 // pred_region
      _
    $region33: #{pre_embedded_graph_encoder_with_attention.1} parent=1 // pred_fallthru
      _
    // Predicated region
    $region34: #{pre_embedded_graph_encoder_with_attention.1} parent=1 // pred_check
      _
    $region35: #{pre_embedded_graph_encoder_with_attention.1} parent=1 // pred_check_branch
      %35 = sbr.rel (0) target = $region37
    $region36: #{pre_embedded_graph_encoder_with_attention.1} parent=1 // pred_region
      _
    $region37: #{pre_embedded_graph_encoder_with_attention.1} parent=1 // pred_fallthru
      _
    // Predicated region
    $region38: #{pre_embedded_graph_encoder_with_attention.1} parent=1 // pred_check
      _
    $region39: #{pre_embedded_graph_encoder_with_attention.1} parent=1 // pred_check_branch
      %37 = sbr.rel (0) target = $region41
    $region40: #{pre_embedded_graph_encoder_with_attention.1} parent=1 // pred_region
      _
    $region41: #{pre_embedded_graph_encoder_with_attention.1} parent=1 // pred_fallthru
      _
    // Predicated region
    $region42: #{pre_embedded_graph_encoder_with_attention.1} parent=1 // pred_check
      _
    $region43: #{pre_embedded_graph_encoder_with_attention.1} parent=1 // pred_check_branch
      %39 = sbr.rel (0) target = $region45
    $region44: #{pre_embedded_graph_encoder_with_attention.1} parent=1 // pred_region
      _
    $region45: #{pre_embedded_graph_encoder_with_attention.1} parent=1 // pred_fallthru
      _
    // Predicated region
    $region46: #{pre_embedded_graph_encoder_with_attention.1} parent=1 // pred_check
      _
    $region47: #{pre_embedded_graph_encoder_with_attention.1} parent=1 // pred_check_branch
      %41 = sbr.rel (0) target = $region49
    $region48: #{pre_embedded_graph_encoder_with_attention.1} parent=1 // pred_region
      _
    $region49: #{pre_embedded_graph_encoder_with_attention.1} parent=1 // pred_fallthru
      _
    %v42 = vld [vmem:[%s0] sm:$0xff]
    %v43 = vld [vmem:[%s0 + $0x8] sm:$0xff]
    %v44 = vld [vmem:[%s1] sm:$0xff]
    %v45 = vld [vmem:[%s1 + $0x8] sm:$0xff]
    %vm46 = vcmask 130048
    %v48 = vsel %vm46, %v44, 0
    %v51 = vsel %vm46, %v45, 0
    %53 = vmatpush.msra.mxu0 0.0
    %54 = vmatpush.msra.mxu0 0.0
    %55 = vmatpush.msra.mxu0 0.0
    %56 = vmatpush.msra.mxu0 0.0
    %57 = vmatpush.msra.mxu0 0.0
    %58 = vmatpush.msra.mxu0 0.0
    %59 = vmatpush.msra.mxu0 0.0
    %60 = vmatpush.msra.mxu0 0.0
    %61 = vmatpush.msra.mxu0 0.0
    %62 = vmatpush.msra.mxu0 0.0
    %63 = vmatpush.msra.mxu0 0.0
    %64 = vmatpush.msra.mxu0 0.0
    %65 = vmatpush.msra.mxu0 0.0
    %66 = vmatpush.msra.mxu0 0.0
    %67 = vmatpush.msra.mxu0 %v43
    %68 = vmatpush.msra.mxu0 %v42
    %69 = vmatmul.f32.gmra.mxu0 %v48
    %v70 = vpop.f32.mrf.mxu0
    %v71 = vadd.f32 0.0, %v70
    %72 = vmatmul.f32.gmra.mxu0 %v51
    %v73 = vpop.f32.mrf.mxu0
    %v74 = vadd.f32 0.0, %v73
    %75 = vdwg.mxu0
    %v76 = vld [vmem:[%s2] sm:$0xff]
    %v77 = vld [vmem:[%s2 + $0x8] sm:$0xff]
    %v78 = vld [vmem:[%s2 + $0x10] sm:$0xff]
    %v79 = vld [vmem:[%s2 + $0x18] sm:$0xff]
    %v80 = vld [vmem:[%s2 + $0x20] sm:$0xff]
    %v81 = vld [vmem:[%s2 + $0x28] sm:$0xff]
    %v82 = vld [vmem:[%s2 + $0x30] sm:$0xff]
    %v83 = vld [vmem:[%s2 + $0x38] sm:$0xff]
    %v84 = vld [vmem:[%s2 + $0x40] sm:$0xff]
    %v85 = vld [vmem:[%s2 + $0x48] sm:$0xff]
    %v86 = vld [vmem:[%s2 + $0x50] sm:$0xff]
    %v87 = vld [vmem:[%s2 + $0x58] sm:$0xff]
    %v88 = vld [vmem:[%s2 + $0x60] sm:$0xff]
    %v89 = vld [vmem:[%s2 + $0x68] sm:$0xff]
    %v90 = vld [vmem:[%s2 + $0x70] sm:$0xff]
    %v91 = vld [vmem:[%s2 + $0x78] sm:$0xff]
    %v92 = vld [vmem:[%s2 + $0x80] sm:$0xff]
    %v93 = vld [vmem:[%s2 + $0x88] sm:$0xff]
    %v94 = vld [vmem:[%s2 + $0x90] sm:$0xff]
    %v95 = vld [vmem:[%s2 + $0x98] sm:$0xff]
    %v96 = vld [vmem:[%s2 + $0xa0] sm:$0xff]
    %v97 = vld [vmem:[%s2 + $0xa8] sm:$0xff]
    %v98 = vld [vmem:[%s2 + $0xb0] sm:$0xff]
    %v99 = vld [vmem:[%s2 + $0xb8] sm:$0xff]
    %v100 = vld [vmem:[%s2 + $0xc0] sm:$0xff]
    %v101 = vld [vmem:[%s2 + $0xc8] sm:$0xff]
    %v102 = vld [vmem:[%s2 + $0xd0] sm:$0xff]
    %v103 = vld [vmem:[%s2 + $0xd8] sm:$0xff]
    %v104 = vld [vmem:[%s2 + $0xe0] sm:$0xff]
    %v105 = vld [vmem:[%s2 + $0xe8] sm:$0xff]
    %v106 = vld [vmem:[%s2 + $0xf0] sm:$0xff]
    %v107 = vld [vmem:[%s2 + $0xf8] sm:$0xff]
    %v108 = vld [vmem:[%s3] sm:$0x1]
    %v110 = vperm.slane %v108, 0
    %112 = vmatpush.msra.mxu0 %v91
    %113 = vmatpush.msra.mxu0 %v90
    %114 = vmatpush.msra.mxu0 %v89
    %115 = vmatpush.msra.mxu0 %v88
    %116 = vmatpush.msra.mxu0 %v87
    %117 = vmatpush.msra.mxu0 %v86
    %118 = vmatpush.msra.mxu0 %v85
    %119 = vmatpush.msra.mxu0 %v84
    %120 = vmatpush.msra.mxu0 %v83
    %121 = vmatpush.msra.mxu0 %v82
    %122 = vmatpush.msra.mxu0 %v81
    %123 = vmatpush.msra.mxu0 %v80
    %124 = vmatpush.msra.mxu0 %v79
    %125 = vmatpush.msra.mxu0 %v78
    %126 = vmatpush.msra.mxu0 %v77
    %127 = vmatpush.msra.mxu0 %v76
    %128 = vmatmul.f32.gmra.mxu0 %v42
    %v129 = vpop.f32.mrf.mxu0
    %v130 = vadd.f32 %v110, %v129
    %131 = vmatmul.f32.gmra.mxu0 %v43
    %v132 = vpop.f32.mrf.mxu0
    %v133 = vadd.f32 %v110, %v132
    %134 = vdwg.mxu0
    %135 = vmatpush.msra.mxu0 %v107
    %136 = vmatpush.msra.mxu0 %v106
    %137 = vmatpush.msra.mxu0 %v105
    %138 = vmatpush.msra.mxu0 %v104
    %139 = vmatpush.msra.mxu0 %v103
    %140 = vmatpush.msra.mxu0 %v102
    %141 = vmatpush.msra.mxu0 %v101
    %142 = vmatpush.msra.mxu0 %v100
    %143 = vmatpush.msra.mxu0 %v99
    %144 = vmatpush.msra.mxu0 %v98
    %145 = vmatpush.msra.mxu0 %v97
    %146 = vmatpush.msra.mxu0 %v96
    %147 = vmatpush.msra.mxu0 %v95
    %148 = vmatpush.msra.mxu0 %v94
    %149 = vmatpush.msra.mxu0 %v93
    %150 = vmatpush.msra.mxu0 %v92
    %151 = vmatmul.f32.gmra.mxu0 %v71
    %v152 = vpop.f32.mrf.mxu0
    %v153 = vadd.f32 %v130, %v152
    %154 = vmatmul.f32.gmra.mxu0 %v74
    %v155 = vpop.f32.mrf.mxu0
    %v156 = vadd.f32 %v133, %v155
    %157 = vdwg.mxu0
    %v158 = vtanh.pop %v153
    %v159 = vtanh.pop %v156
    %160 = vmatpush.msra.mxu0 0.0
    %161 = vmatpush.msra.mxu0 0.0
    %162 = vmatpush.msra.mxu0 0.0
    %163 = vmatpush.msra.mxu0 0.0
    %164 = vmatpush.msra.mxu0 0.0
    %165 = vmatpush.msra.mxu0 0.0
    %166 = vmatpush.msra.mxu0 0.0
    %167 = vmatpush.msra.mxu0 0.0
    %168 = vmatpush.msra.mxu0 0.0
    %169 = vmatpush.msra.mxu0 0.0
    %170 = vmatpush.msra.mxu0 0.0
    %171 = vmatpush.msra.mxu0 0.0
    %172 = vmatpush.msra.mxu0 0.0
    %173 = vmatpush.msra.mxu0 0.0
    %174 = vmatpush.msra.mxu0 %v159
    %175 = vmatpush.msra.mxu0 %v158
    %176 = vmatmul.f32.gmra.mxu0 %v48
    %v177 = vpop.f32.mrf.mxu0
    %v178 = vadd.f32 0.0, %v177
    %179 = vmatmul.f32.gmra.mxu0 %v51
    %v180 = vpop.f32.mrf.mxu0
    %v181 = vadd.f32 0.0, %v180
    %182 = vdwg.mxu0
    %s183 = scalar_lea.vmem %s2, 256
    %v184 = vld [vmem:[%s183] sm:$0xff]
    %v185 = vld [vmem:[%s183 + $0x8] sm:$0xff]
    %v186 = vld [vmem:[%s183 + $0x10] sm:$0xff]
    %v187 = vld [vmem:[%s183 + $0x18] sm:$0xff]
    %v188 = vld [vmem:[%s183 + $0x20] sm:$0xff]
    %v189 = vld [vmem:[%s183 + $0x28] sm:$0xff]
    %v190 = vld [vmem:[%s183 + $0x30] sm:$0xff]
    %v191 = vld [vmem:[%s183 + $0x38] sm:$0xff]
    %v192 = vld [vmem:[%s183 + $0x40] sm:$0xff]
    %v193 = vld [vmem:[%s183 + $0x48] sm:$0xff]
    %v194 = vld [vmem:[%s183 + $0x50] sm:$0xff]
    %v195 = vld [vmem:[%s183 + $0x58] sm:$0xff]
    %v196 = vld [vmem:[%s183 + $0x60] sm:$0xff]
    %v197 = vld [vmem:[%s183 + $0x68] sm:$0xff]
    %v198 = vld [vmem:[%s183 + $0x70] sm:$0xff]
    %v199 = vld [vmem:[%s183 + $0x78] sm:$0xff]
    %v200 = vld [vmem:[%s183 + $0x80] sm:$0xff]
    %v201 = vld [vmem:[%s183 + $0x88] sm:$0xff]
    %v202 = vld [vmem:[%s183 + $0x90] sm:$0xff]
    %v203 = vld [vmem:[%s183 + $0x98] sm:$0xff]
    %v204 = vld [vmem:[%s183 + $0xa0] sm:$0xff]
    %v205 = vld [vmem:[%s183 + $0xa8] sm:$0xff]
    %v206 = vld [vmem:[%s183 + $0xb0] sm:$0xff]
    %v207 = vld [vmem:[%s183 + $0xb8] sm:$0xff]
    %v208 = vld [vmem:[%s183 + $0xc0] sm:$0xff]
    %v209 = vld [vmem:[%s183 + $0xc8] sm:$0xff]
    %v210 = vld [vmem:[%s183 + $0xd0] sm:$0xff]
    %v211 = vld [vmem:[%s183 + $0xd8] sm:$0xff]
    %v212 = vld [vmem:[%s183 + $0xe0] sm:$0xff]
    %v213 = vld [vmem:[%s183 + $0xe8] sm:$0xff]
    %v214 = vld [vmem:[%s183 + $0xf0] sm:$0xff]
    %v215 = vld [vmem:[%s183 + $0xf8] sm:$0xff]
    %s216 = scalar_lea.vmem %s3, 1
    %v217 = vld [vmem:[%s216] sm:$0x1]
    %v219 = vperm.slane %v217, 0
    %221 = vmatpush.msra.mxu0 %v199
    %222 = vmatpush.msra.mxu0 %v198
    %223 = vmatpush.msra.mxu0 %v197
    %224 = vmatpush.msra.mxu0 %v196
    %225 = vmatpush.msra.mxu0 %v195
    %226 = vmatpush.msra.mxu0 %v194
    %227 = vmatpush.msra.mxu0 %v193
    %228 = vmatpush.msra.mxu0 %v192
    %229 = vmatpush.msra.mxu0 %v191
    %230 = vmatpush.msra.mxu0 %v190
    %231 = vmatpush.msra.mxu0 %v189
    %232 = vmatpush.msra.mxu0 %v188
    %233 = vmatpush.msra.mxu0 %v187
    %234 = vmatpush.msra.mxu0 %v186
    %235 = vmatpush.msra.mxu0 %v185
    %236 = vmatpush.msra.mxu0 %v184
    %237 = vmatmul.f32.gmra.mxu0 %v158
    %v238 = vpop.f32.mrf.mxu0
    %v239 = vadd.f32 %v219, %v238
    %240 = vmatmul.f32.gmra.mxu0 %v159
    %v241 = vpop.f32.mrf.mxu0
    %v242 = vadd.f32 %v219, %v241
    %243 = vdwg.mxu0
    %244 = vmatpush.msra.mxu0 %v215
    %245 = vmatpush.msra.mxu0 %v214
    %246 = vmatpush.msra.mxu0 %v213
    %247 = vmatpush.msra.mxu0 %v212
    %248 = vmatpush.msra.mxu0 %v211
    %249 = vmatpush.msra.mxu0 %v210
    %250 = vmatpush.msra.mxu0 %v209
    %251 = vmatpush.msra.mxu0 %v208
    %252 = vmatpush.msra.mxu0 %v207
    %253 = vmatpush.msra.mxu0 %v206
    %254 = vmatpush.msra.mxu0 %v205
    %255 = vmatpush.msra.mxu0 %v204
    %256 = vmatpush.msra.mxu0 %v203
    %257 = vmatpush.msra.mxu0 %v202
    %258 = vmatpush.msra.mxu0 %v201
    %259 = vmatpush.msra.mxu0 %v200
    %260 = vmatmul.f32.gmra.mxu0 %v178
    %v261 = vpop.f32.mrf.mxu0
    %v262 = vadd.f32 %v239, %v261
    %263 = vmatmul.f32.gmra.mxu0 %v181
    %v264 = vpop.f32.mrf.mxu0
    %v265 = vadd.f32 %v242, %v264
    %266 = vdwg.mxu0
    %v267 = vtanh.pop %v262
    %v268 = vtanh.pop %v265
    %269 = vmatpush.msra.mxu0 0.0
    %270 = vmatpush.msra.mxu0 0.0
    %271 = vmatpush.msra.mxu0 0.0
    %272 = vmatpush.msra.mxu0 0.0
    %273 = vmatpush.msra.mxu0 0.0
    %274 = vmatpush.msra.mxu0 0.0
    %275 = vmatpush.msra.mxu0 0.0
    %276 = vmatpush.msra.mxu0 0.0
    %277 = vmatpush.msra.mxu0 0.0
    %278 = vmatpush.msra.mxu0 0.0
    %279 = vmatpush.msra.mxu0 0.0
    %280 = vmatpush.msra.mxu0 0.0
    %281 = vmatpush.msra.mxu0 0.0
    %282 = vmatpush.msra.mxu0 0.0
    %283 = vmatpush.msra.mxu0 %v268
    %284 = vmatpush.msra.mxu0 %v267
    %285 = vmatmul.f32.gmra.mxu0 %v48
    %v286 = vpop.f32.mrf.mxu0
    %v287 = vadd.f32 0.0, %v286
    %288 = vmatmul.f32.gmra.mxu0 %v51
    %v289 = vpop.f32.mrf.mxu0
    %v290 = vadd.f32 0.0, %v289
    %291 = vdwg.mxu0
    %s292 = scalar_lea.vmem %s2, 512
    %v293 = vld [vmem:[%s292] sm:$0xff]
    %v294 = vld [vmem:[%s292 + $0x8] sm:$0xff]
    %v295 = vld [vmem:[%s292 + $0x10] sm:$0xff]
    %v296 = vld [vmem:[%s292 + $0x18] sm:$0xff]
    %v297 = vld [vmem:[%s292 + $0x20] sm:$0xff]
    %v298 = vld [vmem:[%s292 + $0x28] sm:$0xff]
    %v299 = vld [vmem:[%s292 + $0x30] sm:$0xff]
    %v300 = vld [vmem:[%s292 + $0x38] sm:$0xff]
    %v301 = vld [vmem:[%s292 + $0x40] sm:$0xff]
    %v302 = vld [vmem:[%s292 + $0x48] sm:$0xff]
    %v303 = vld [vmem:[%s292 + $0x50] sm:$0xff]
    %v304 = vld [vmem:[%s292 + $0x58] sm:$0xff]
    %v305 = vld [vmem:[%s292 + $0x60] sm:$0xff]
    %v306 = vld [vmem:[%s292 + $0x68] sm:$0xff]
    %v307 = vld [vmem:[%s292 + $0x70] sm:$0xff]
    %v308 = vld [vmem:[%s292 + $0x78] sm:$0xff]
    %v309 = vld [vmem:[%s292 + $0x80] sm:$0xff]
    %v310 = vld [vmem:[%s292 + $0x88] sm:$0xff]
    %v311 = vld [vmem:[%s292 + $0x90] sm:$0xff]
    %v312 = vld [vmem:[%s292 + $0x98] sm:$0xff]
    %v313 = vld [vmem:[%s292 + $0xa0] sm:$0xff]
    %v314 = vld [vmem:[%s292 + $0xa8] sm:$0xff]
    %v315 = vld [vmem:[%s292 + $0xb0] sm:$0xff]
    %v316 = vld [vmem:[%s292 + $0xb8] sm:$0xff]
    %v317 = vld [vmem:[%s292 + $0xc0] sm:$0xff]
    %v318 = vld [vmem:[%s292 + $0xc8] sm:$0xff]
    %v319 = vld [vmem:[%s292 + $0xd0] sm:$0xff]
    %v320 = vld [vmem:[%s292 + $0xd8] sm:$0xff]
    %v321 = vld [vmem:[%s292 + $0xe0] sm:$0xff]
    %v322 = vld [vmem:[%s292 + $0xe8] sm:$0xff]
    %v323 = vld [vmem:[%s292 + $0xf0] sm:$0xff]
    %v324 = vld [vmem:[%s292 + $0xf8] sm:$0xff]
    %s325 = scalar_lea.vmem %s3, 2
    %v326 = vld [vmem:[%s325] sm:$0x1]
    %v328 = vperm.slane %v326, 0
    %330 = vmatpush.msra.mxu0 %v308
    %331 = vmatpush.msra.mxu0 %v307
    %332 = vmatpush.msra.mxu0 %v306
    %333 = vmatpush.msra.mxu0 %v305
    %334 = vmatpush.msra.mxu0 %v304
    %335 = vmatpush.msra.mxu0 %v303
    %336 = vmatpush.msra.mxu0 %v302
    %337 = vmatpush.msra.mxu0 %v301
    %338 = vmatpush.msra.mxu0 %v300
    %339 = vmatpush.msra.mxu0 %v299
    %340 = vmatpush.msra.mxu0 %v298
    %341 = vmatpush.msra.mxu0 %v297
    %342 = vmatpush.msra.mxu0 %v296
    %343 = vmatpush.msra.mxu0 %v295
    %344 = vmatpush.msra.mxu0 %v294
    %345 = vmatpush.msra.mxu0 %v293
    %346 = vmatmul.f32.gmra.mxu0 %v267
    %v347 = vpop.f32.mrf.mxu0
    %v348 = vadd.f32 %v328, %v347
    %349 = vmatmul.f32.gmra.mxu0 %v268
    %v350 = vpop.f32.mrf.mxu0
    %v351 = vadd.f32 %v328, %v350
    %352 = vdwg.mxu0
    %353 = vmatpush.msra.mxu0 %v324
    %354 = vmatpush.msra.mxu0 %v323
    %355 = vmatpush.msra.mxu0 %v322
    %356 = vmatpush.msra.mxu0 %v321
    %357 = vmatpush.msra.mxu0 %v320
    %358 = vmatpush.msra.mxu0 %v319
    %359 = vmatpush.msra.mxu0 %v318
    %360 = vmatpush.msra.mxu0 %v317
    %361 = vmatpush.msra.mxu0 %v316
    %362 = vmatpush.msra.mxu0 %v315
    %363 = vmatpush.msra.mxu0 %v314
    %364 = vmatpush.msra.mxu0 %v313
    %365 = vmatpush.msra.mxu0 %v312
    %366 = vmatpush.msra.mxu0 %v311
    %367 = vmatpush.msra.mxu0 %v310
    %368 = vmatpush.msra.mxu0 %v309
    %369 = vmatmul.f32.gmra.mxu0 %v287
    %v370 = vpop.f32.mrf.mxu0
    %v371 = vadd.f32 %v348, %v370
    %372 = vmatmul.f32.gmra.mxu0 %v290
    %v373 = vpop.f32.mrf.mxu0
    %v374 = vadd.f32 %v351, %v373
    %375 = vdwg.mxu0
    %v376 = vtanh.pop %v371
    %v377 = vtanh.pop %v374
    %378 = vmatpush.msra.mxu0 0.0
    %379 = vmatpush.msra.mxu0 0.0
    %380 = vmatpush.msra.mxu0 0.0
    %381 = vmatpush.msra.mxu0 0.0
    %382 = vmatpush.msra.mxu0 0.0
    %383 = vmatpush.msra.mxu0 0.0
    %384 = vmatpush.msra.mxu0 0.0
    %385 = vmatpush.msra.mxu0 0.0
    %386 = vmatpush.msra.mxu0 0.0
    %387 = vmatpush.msra.mxu0 0.0
    %388 = vmatpush.msra.mxu0 0.0
    %389 = vmatpush.msra.mxu0 0.0
    %390 = vmatpush.msra.mxu0 0.0
    %391 = vmatpush.msra.mxu0 0.0
    %392 = vmatpush.msra.mxu0 %v377
    %393 = vmatpush.msra.mxu0 %v376
    %394 = vmatmul.f32.gmra.mxu0 %v48
    %v395 = vpop.f32.mrf.mxu0
    %v396 = vadd.f32 0.0, %v395
    %397 = vmatmul.f32.gmra.mxu0 %v51
    %v398 = vpop.f32.mrf.mxu0
    %v399 = vadd.f32 0.0, %v398
    %400 = vdwg.mxu0
    %s401 = scalar_lea.vmem %s2, 768
    %v402 = vld [vmem:[%s401] sm:$0xff]
    %v403 = vld [vmem:[%s401 + $0x8] sm:$0xff]
    %v404 = vld [vmem:[%s401 + $0x10] sm:$0xff]
    %v405 = vld [vmem:[%s401 + $0x18] sm:$0xff]
    %v406 = vld [vmem:[%s401 + $0x20] sm:$0xff]
    %v407 = vld [vmem:[%s401 + $0x28] sm:$0xff]
    %v408 = vld [vmem:[%s401 + $0x30] sm:$0xff]
    %v409 = vld [vmem:[%s401 + $0x38] sm:$0xff]
    %v410 = vld [vmem:[%s401 + $0x40] sm:$0xff]
    %v411 = vld [vmem:[%s401 + $0x48] sm:$0xff]
    %v412 = vld [vmem:[%s401 + $0x50] sm:$0xff]
    %v413 = vld [vmem:[%s401 + $0x58] sm:$0xff]
    %v414 = vld [vmem:[%s401 + $0x60] sm:$0xff]
    %v415 = vld [vmem:[%s401 + $0x68] sm:$0xff]
    %v416 = vld [vmem:[%s401 + $0x70] sm:$0xff]
    %v417 = vld [vmem:[%s401 + $0x78] sm:$0xff]
    %v418 = vld [vmem:[%s401 + $0x80] sm:$0xff]
    %v419 = vld [vmem:[%s401 + $0x88] sm:$0xff]
    %v420 = vld [vmem:[%s401 + $0x90] sm:$0xff]
    %v421 = vld [vmem:[%s401 + $0x98] sm:$0xff]
    %v422 = vld [vmem:[%s401 + $0xa0] sm:$0xff]
    %v423 = vld [vmem:[%s401 + $0xa8] sm:$0xff]
    %v424 = vld [vmem:[%s401 + $0xb0] sm:$0xff]
    %v425 = vld [vmem:[%s401 + $0xb8] sm:$0xff]
    %v426 = vld [vmem:[%s401 + $0xc0] sm:$0xff]
    %v427 = vld [vmem:[%s401 + $0xc8] sm:$0xff]
    %v428 = vld [vmem:[%s401 + $0xd0] sm:$0xff]
    %v429 = vld [vmem:[%s401 + $0xd8] sm:$0xff]
    %v430 = vld [vmem:[%s401 + $0xe0] sm:$0xff]
    %v431 = vld [vmem:[%s401 + $0xe8] sm:$0xff]
    %v432 = vld [vmem:[%s401 + $0xf0] sm:$0xff]
    %v433 = vld [vmem:[%s401 + $0xf8] sm:$0xff]
    %s434 = scalar_lea.vmem %s3, 3
    %v435 = vld [vmem:[%s434] sm:$0x1]
    %v437 = vperm.slane %v435, 0
    %439 = vmatpush.msra.mxu0 %v417
    %440 = vmatpush.msra.mxu0 %v416
    %441 = vmatpush.msra.mxu0 %v415
    %442 = vmatpush.msra.mxu0 %v414
    %443 = vmatpush.msra.mxu0 %v413
    %444 = vmatpush.msra.mxu0 %v412
    %445 = vmatpush.msra.mxu0 %v411
    %446 = vmatpush.msra.mxu0 %v410
    %447 = vmatpush.msra.mxu0 %v409
    %448 = vmatpush.msra.mxu0 %v408
    %449 = vmatpush.msra.mxu0 %v407
    %450 = vmatpush.msra.mxu0 %v406
    %451 = vmatpush.msra.mxu0 %v405
    %452 = vmatpush.msra.mxu0 %v404
    %453 = vmatpush.msra.mxu0 %v403
    %454 = vmatpush.msra.mxu0 %v402
    %455 = vmatmul.f32.gmra.mxu0 %v376
    %v456 = vpop.f32.mrf.mxu0
    %v457 = vadd.f32 %v437, %v456
    %458 = vmatmul.f32.gmra.mxu0 %v377
    %v459 = vpop.f32.mrf.mxu0
    %v460 = vadd.f32 %v437, %v459
    %461 = vdwg.mxu0
    %462 = vmatpush.msra.mxu0 %v433
    %463 = vmatpush.msra.mxu0 %v432
    %464 = vmatpush.msra.mxu0 %v431
    %465 = vmatpush.msra.mxu0 %v430
    %466 = vmatpush.msra.mxu0 %v429
    %467 = vmatpush.msra.mxu0 %v428
    %468 = vmatpush.msra.mxu0 %v427
    %469 = vmatpush.msra.mxu0 %v426
    %470 = vmatpush.msra.mxu0 %v425
    %471 = vmatpush.msra.mxu0 %v424
    %472 = vmatpush.msra.mxu0 %v423
    %473 = vmatpush.msra.mxu0 %v422
    %474 = vmatpush.msra.mxu0 %v421
    %475 = vmatpush.msra.mxu0 %v420
    %476 = vmatpush.msra.mxu0 %v419
    %477 = vmatpush.msra.mxu0 %v418
    %478 = vmatmul.f32.gmra.mxu0 %v396
    %v479 = vpop.f32.mrf.mxu0
    %v480 = vadd.f32 %v457, %v479
    %481 = vmatmul.f32.gmra.mxu0 %v399
    %v482 = vpop.f32.mrf.mxu0
    %v483 = vadd.f32 %v460, %v482
    %484 = vdwg.mxu0
    %v485 = vtanh.pop %v480
    %v486 = vtanh.pop %v483
    %v487 = vld [vmem:[%s4] sm:$0xff]
    %v488 = vld [vmem:[%s4 + $0x8] sm:$0xff]
    %v489 = vld [vmem:[%s4 + $0x10] sm:$0xff]
    %v490 = vld [vmem:[%s4 + $0x18] sm:$0xff]
    %v491 = vld [vmem:[%s4 + $0x20] sm:$0xff]
    %v492 = vld [vmem:[%s4 + $0x28] sm:$0xff]
    %v493 = vld [vmem:[%s4 + $0x30] sm:$0xff]
    %v494 = vld [vmem:[%s4 + $0x38] sm:$0xff]
    %v495 = vld [vmem:[%s4 + $0x40] sm:$0xff]
    %v496 = vld [vmem:[%s4 + $0x48] sm:$0xff]
    %v497 = vld [vmem:[%s4 + $0x50] sm:$0xff]
    %v498 = vld [vmem:[%s4 + $0x58] sm:$0xff]
    %v499 = vld [vmem:[%s4 + $0x60] sm:$0xff]
    %v500 = vld [vmem:[%s4 + $0x68] sm:$0xff]
    %v501 = vld [vmem:[%s4 + $0x70] sm:$0xff]
    %v502 = vld [vmem:[%s4 + $0x78] sm:$0xff]
    %v503 = vld [vmem:[%s5] sm:$0x1]
    %v505 = vperm.slane %v503, 0
    %507 = vmatpush.msra.mxu0 %v502
    %508 = vmatpush.msra.mxu0 %v501
    %509 = vmatpush.msra.mxu0 %v500
    %510 = vmatpush.msra.mxu0 %v499
    %511 = vmatpush.msra.mxu0 %v498
    %512 = vmatpush.msra.mxu0 %v497
    %513 = vmatpush.msra.mxu0 %v496
    %514 = vmatpush.msra.mxu0 %v495
    %515 = vmatpush.msra.mxu0 %v494
    %516 = vmatpush.msra.mxu0 %v493
    %517 = vmatpush.msra.mxu0 %v492
    %518 = vmatpush.msra.mxu0 %v491
    %519 = vmatpush.msra.mxu0 %v490
    %520 = vmatpush.msra.mxu0 %v489
    %521 = vmatpush.msra.mxu0 %v488
    %522 = vmatpush.msra.mxu0 %v487
    %523 = vmatmul.f32.gmra.mxu0 %v42
    %v524 = vpop.f32.mrf.mxu0
    %v525 = vadd.f32 %v505, %v524
    %526 = vmatmul.f32.gmra.mxu0 %v43
    %v527 = vpop.f32.mrf.mxu0
    %v528 = vadd.f32 %v505, %v527
    %529 = vdwg.mxu0
    %v530 = vld [vmem:[%s6] sm:$0xff]
    %v531 = vld [vmem:[%s6 + $0x8] sm:$0xff]
    %v532 = vld [vmem:[%s6 + $0x10] sm:$0xff]
    %v533 = vld [vmem:[%s6 + $0x18] sm:$0xff]
    %v534 = vld [vmem:[%s6 + $0x20] sm:$0xff]
    %v535 = vld [vmem:[%s6 + $0x28] sm:$0xff]
    %v536 = vld [vmem:[%s6 + $0x30] sm:$0xff]
    %v537 = vld [vmem:[%s6 + $0x38] sm:$0xff]
    %v538 = vld [vmem:[%s6 + $0x40] sm:$0xff]
    %v539 = vld [vmem:[%s6 + $0x48] sm:$0xff]
    %v540 = vld [vmem:[%s6 + $0x50] sm:$0xff]
    %v541 = vld [vmem:[%s6 + $0x58] sm:$0xff]
    %v542 = vld [vmem:[%s6 + $0x60] sm:$0xff]
    %v543 = vld [vmem:[%s6 + $0x68] sm:$0xff]
    %v544 = vld [vmem:[%s6 + $0x70] sm:$0xff]
    %v545 = vld [vmem:[%s6 + $0x78] sm:$0xff]
    %v546 = vld [vmem:[%s7] sm:$0x1]
    %v548 = vperm.slane %v546, 0
    %550 = vmatpush.msra.mxu0 %v545
    %551 = vmatpush.msra.mxu0 %v544
    %552 = vmatpush.msra.mxu0 %v543
    %553 = vmatpush.msra.mxu0 %v542
    %554 = vmatpush.msra.mxu0 %v541
    %555 = vmatpush.msra.mxu0 %v540
    %556 = vmatpush.msra.mxu0 %v539
    %557 = vmatpush.msra.mxu0 %v538
    %558 = vmatpush.msra.mxu0 %v537
    %559 = vmatpush.msra.mxu0 %v536
    %560 = vmatpush.msra.mxu0 %v535
    %561 = vmatpush.msra.mxu0 %v534
    %562 = vmatpush.msra.mxu0 %v533
    %563 = vmatpush.msra.mxu0 %v532
    %564 = vmatpush.msra.mxu0 %v531
    %565 = vmatpush.msra.mxu0 %v530
    %566 = vmatmul.f32.gmra.mxu0 %v42
    %v567 = vpop.f32.mrf.mxu0
    %v568 = vadd.f32 %v548, %v567
    %569 = vmatmul.f32.gmra.mxu0 %v43
    %v570 = vpop.f32.mrf.mxu0
    %v571 = vadd.f32 %v548, %v570
    %572 = vdwg.mxu0
    %v573 = vld [vmem:[%s8] sm:$0xff]
    %v574 = vld [vmem:[%s8 + $0x8] sm:$0xff]
    %v575 = vld [vmem:[%s8 + $0x10] sm:$0xff]
    %v576 = vld [vmem:[%s8 + $0x18] sm:$0xff]
    %v577 = vld [vmem:[%s8 + $0x20] sm:$0xff]
    %v578 = vld [vmem:[%s8 + $0x28] sm:$0xff]
    %v579 = vld [vmem:[%s8 + $0x30] sm:$0xff]
    %v580 = vld [vmem:[%s8 + $0x38] sm:$0xff]
    %v581 = vld [vmem:[%s8 + $0x40] sm:$0xff]
    %v582 = vld [vmem:[%s8 + $0x48] sm:$0xff]
    %v583 = vld [vmem:[%s8 + $0x50] sm:$0xff]
    %v584 = vld [vmem:[%s8 + $0x58] sm:$0xff]
    %v585 = vld [vmem:[%s8 + $0x60] sm:$0xff]
    %v586 = vld [vmem:[%s8 + $0x68] sm:$0xff]
    %v587 = vld [vmem:[%s8 + $0x70] sm:$0xff]
    %v588 = vld [vmem:[%s8 + $0x78] sm:$0xff]
    %v589 = vld [vmem:[%s9] sm:$0x1]
    %v591 = vperm.slane %v589, 0
    %593 = vmatpush.msra.mxu0 %v588
    %594 = vmatpush.msra.mxu0 %v587
    %595 = vmatpush.msra.mxu0 %v586
    %596 = vmatpush.msra.mxu0 %v585
    %597 = vmatpush.msra.mxu0 %v584
    %598 = vmatpush.msra.mxu0 %v583
    %599 = vmatpush.msra.mxu0 %v582
    %600 = vmatpush.msra.mxu0 %v581
    %601 = vmatpush.msra.mxu0 %v580
    %602 = vmatpush.msra.mxu0 %v579
    %603 = vmatpush.msra.mxu0 %v578
    %604 = vmatpush.msra.mxu0 %v577
    %605 = vmatpush.msra.mxu0 %v576
    %606 = vmatpush.msra.mxu0 %v575
    %607 = vmatpush.msra.mxu0 %v574
    %608 = vmatpush.msra.mxu0 %v573
    %609 = vmatmul.f32.gmra.mxu0 %v42
    %v610 = vpop.f32.mrf.mxu0
    %v611 = vadd.f32 %v591, %v610
    %612 = vmatmul.f32.gmra.mxu0 %v43
    %v613 = vpop.f32.mrf.mxu0
    %v614 = vadd.f32 %v591, %v613
    %615 = vdwg.mxu0
    %616 = vmatpush.xpose.msra.mxu0 0.0
    %617 = vmatpush.xpose.msra.mxu0 0.0
    %618 = vmatpush.xpose.msra.mxu0 0.0
    %619 = vmatpush.xpose.msra.mxu0 0.0
    %620 = vmatpush.xpose.msra.mxu0 0.0
    %621 = vmatpush.xpose.msra.mxu0 0.0
    %622 = vmatpush.xpose.msra.mxu0 0.0
    %623 = vmatpush.xpose.msra.mxu0 0.0
    %624 = vmatpush.xpose.msra.mxu0 0.0
    %625 = vmatpush.xpose.msra.mxu0 0.0
    %626 = vmatpush.xpose.msra.mxu0 0.0
    %627 = vmatpush.xpose.msra.mxu0 0.0
    %628 = vmatpush.xpose.msra.mxu0 0.0
    %629 = vmatpush.xpose.msra.mxu0 0.0
    %630 = vmatpush.xpose.msra.mxu0 %v571
    %631 = vmatpush.xpose.msra.mxu0 %v568
    %632 = vmatmul.f32.gmra.mxu0 %v525
    %v633 = vpop.f32.mrf.mxu0
    %v634 = vadd.f32 0.0, %v633
    %635 = vmatmul.f32.gmra.mxu0 %v528
    %v636 = vpop.f32.mrf.mxu0
    %v637 = vadd.f32 0.0, %v636
    %638 = vdwg.mxu0
    %v639 = vsel %vm46, %v634, -inf
    %640 = vmax.xlane.f32.xlu0 %v639
    %v641 = vpop.xlane.xlu0 %640
    %v642 = vsel %vm46, %v637, -inf
    %643 = vmax.xlane.f32.xlu0 %v642
    %v644 = vpop.xlane.xlu0 %643
    %v645 = vsub.f32 %v634, %v641
    %v646 = vsub.f32 %v637, %v644
    %v647 = vmul.f32 %v645, 1.442695
    %v648 = vpow.pop %v647
    %v649 = vmul.f32 %v646, 1.442695
    %v650 = vpow.pop %v649
    %v651 = vsel %vm46, %v648, 0.0
    %652 = vadd.xlane.f32.xlu0 %v651
    %v653 = vpop.xlane.xlu0 %652
    %v654 = vsel %vm46, %v650, 0.0
    %655 = vadd.xlane.f32.xlu0 %v654
    %v656 = vpop.xlane.xlu0 %655
    %v657 = vrcp.pop %v653
    %v658 = vrcp.pop %v656
    %v659 = vmul.f32 %v648, %v657
    %v660 = vmul.f32 %v650, %v658
    %v662 = vsel %vm46, %v659, 0
    %v665 = vsel %vm46, %v660, 0
    %667 = vmatpush.msra.mxu0 0.0
    %668 = vmatpush.msra.mxu0 0.0
    %669 = vmatpush.msra.mxu0 0.0
    %670 = vmatpush.msra.mxu0 0.0
    %671 = vmatpush.msra.mxu0 0.0
    %672 = vmatpush.msra.mxu0 0.0
    %673 = vmatpush.msra.mxu0 0.0
    %674 = vmatpush.msra.mxu0 0.0
    %675 = vmatpush.msra.mxu0 0.0
    %676 = vmatpush.msra.mxu0 0.0
    %677 = vmatpush.msra.mxu0 0.0
    %678 = vmatpush.msra.mxu0 0.0
    %679 = vmatpush.msra.mxu0 0.0
    %680 = vmatpush.msra.mxu0 0.0
    %681 = vmatpush.msra.mxu0 %v614
    %682 = vmatpush.msra.mxu0 %v611
    %683 = vmatmul.f32.gmra.mxu0 %v662
    %v684 = vpop.f32.mrf.mxu0
    %v685 = vadd.f32 0.0, %v684
    %686 = vmatmul.f32.gmra.mxu0 %v665
    %v687 = vpop.f32.mrf.mxu0
    %v688 = vadd.f32 0.0, %v687
    %689 = vdwg.mxu0
    %v690 = vld [vmem:[%s10] sm:$0xff]
    %v691 = vld [vmem:[%s10 + $0x8] sm:$0xff]
    %v692 = vld [vmem:[%s10 + $0x10] sm:$0xff]
    %v693 = vld [vmem:[%s10 + $0x18] sm:$0xff]
    %v694 = vld [vmem:[%s10 + $0x20] sm:$0xff]
    %v695 = vld [vmem:[%s10 + $0x28] sm:$0xff]
    %v696 = vld [vmem:[%s10 + $0x30] sm:$0xff]
    %v697 = vld [vmem:[%s10 + $0x38] sm:$0xff]
    %v698 = vld [vmem:[%s10 + $0x40] sm:$0xff]
    %v699 = vld [vmem:[%s10 + $0x48] sm:$0xff]
    %v700 = vld [vmem:[%s10 + $0x50] sm:$0xff]
    %v701 = vld [vmem:[%s10 + $0x58] sm:$0xff]
    %v702 = vld [vmem:[%s10 + $0x60] sm:$0xff]
    %v703 = vld [vmem:[%s10 + $0x68] sm:$0xff]
    %v704 = vld [vmem:[%s10 + $0x70] sm:$0xff]
    %v705 = vld [vmem:[%s10 + $0x78] sm:$0xff]
    %v706 = vld [vmem:[%s11] sm:$0x1]
    %v708 = vperm.slane %v706, 0
    %710 = vmatpush.msra.mxu0 %v705
    %711 = vmatpush.msra.mxu0 %v704
    %712 = vmatpush.msra.mxu0 %v703
    %713 = vmatpush.msra.mxu0 %v702
    %714 = vmatpush.msra.mxu0 %v701
    %715 = vmatpush.msra.mxu0 %v700
    %716 = vmatpush.msra.mxu0 %v699
    %717 = vmatpush.msra.mxu0 %v698
    %718 = vmatpush.msra.mxu0 %v697
    %719 = vmatpush.msra.mxu0 %v696
    %720 = vmatpush.msra.mxu0 %v695
    %721 = vmatpush.msra.mxu0 %v694
    %722 = vmatpush.msra.mxu0 %v693
    %723 = vmatpush.msra.mxu0 %v692
    %724 = vmatpush.msra.mxu0 %v691
    %725 = vmatpush.msra.mxu0 %v690
    %726 = vmatmul.f32.gmra.mxu0 %v685
    %v727 = vpop.f32.mrf.mxu0
    %v728 = vadd.f32 %v708, %v727
    %729 = vmatmul.f32.gmra.mxu0 %v688
    %v730 = vpop.f32.mrf.mxu0
    %v731 = vadd.f32 %v708, %v730
    %732 = vdwg.mxu0
    %733 = vst [vmem:[#allocation2] sm:$0xff] %v485
    %734 = vst [vmem:[#allocation2 + $0x10] sm:$0xff] %v486
    %735 = vst [vmem:[#allocation2 + $0x8] sm:$0xff] %v728
    %736 = vst [vmem:[#allocation2 + $0x18] sm:$0xff] %v731
    // Predicated region
    $region50: #{pre_embedded_graph_encoder_with_attention.1} parent=1 // pred_check
      _
    $region51: #{pre_embedded_graph_encoder_with_attention.1} parent=1 // pred_check_branch
      %738 = sbr.rel (0) target = $region53
    $region52: #{pre_embedded_graph_encoder_with_attention.1} parent=1 // pred_region
      %740 = vsyncadd [#allocation3], 0
      %s741 = sshll.u32 [#allocation2], 4
      %s742 = int_to_ptr.vmem [resolvable:$true] %s741
      %s743 = sshll.u32 %s12, 4
      %s744 = int_to_ptr.hbm [resolvable:$true] %s743
      %749 = dma.vmem_to_hbm [thread:$0]  %s742, 512, %s744, [#allocation3], 256, 256, 16
    $region53: #{pre_embedded_graph_encoder_with_attention.1} parent=1 // pred_fallthru
      _
    // Predicated region
    $region54: #{pre_embedded_graph_encoder_with_attention.1} parent=1 // pred_check
      _
    $region55: #{pre_embedded_graph_encoder_with_attention.1} parent=1 // pred_check_branch
      %751 = sbr.rel (0) target = $region57
    $region56: #{pre_embedded_graph_encoder_with_attention.1} parent=1 // pred_region
      %753 = dma.done [#allocation3], 512
    $region57: #{pre_embedded_graph_encoder_with_attention.1} parent=1 // pred_fallthru
      _
    %754 = vsyncpa [#allocation3], 1

</llo_original>
